<compile_context>
chip_gen: v7x
topology: tpu7x:2x2x1
jax: 0.10.0
libtpu: 0.0.40
codegen_flags: <defaults>
</compile_context>

<pallas_src>
import math
import functools

import jax
import jax.numpy as jnp
from jax import lax
from jax.experimental import pallas as pl
from jax.experimental.pallas import tpu as pltpu


def _svm_loss_kernel(x_ref, y_ref, o_ref, *, tau, alpha, thresh, n_samples):
    pid = pl.program_id(0)

    x = x_ref[...]                      # (C, TN) native dtype (f32 or bf16)
    y = y_ref[...]                      # (1, TN) int32
    c, tn = x.shape

    lane = lax.broadcasted_iota(jnp.int32, (1, tn), 1)
    valid = (pid * tn + lane) < n_samples               # mask padded lanes

    cls = lax.broadcasted_iota(jnp.int32, (c, tn), 0)   # class id per sublane
    is_y = cls == y                                      # (C, TN) bool

    # hard <=> only the max exceeds (max1 - margin); equivalent to the top-2
    # test because margin = tau*log(thresh) > 0 (ties at the max -> smooth).
    margin = jnp.asarray(tau * math.log(thresh), dtype=x.dtype)
    max1 = jnp.max(x, axis=0, keepdims=True)             # (1, TN)
    n_above = jnp.sum((x > (max1 - margin)).astype(jnp.int32),
                      axis=0, keepdims=True)
    hard = n_above <= 1
    smooth = jnp.logical_not(hard)

    xf = x.astype(jnp.float32)
    # gather x[i, y[i]] via select (exactly one class matches per sample)
    x_y = jnp.sum(jnp.where(is_y, xf, 0.0), axis=0, keepdims=True)   # (1, TN)

    inv_tau = jnp.float32(1.0 / tau)
    a_over_tau = jnp.float32(alpha / tau)
    z = (xf - x_y) * inv_tau
    z = jnp.where(is_y, z, z + a_over_tau)               # (C, TN): (x+a*delta-x_y)/tau

    m = jnp.max(z, axis=0, keepdims=True)                # (1, TN)
    lse = jnp.log(jnp.sum(jnp.exp(z - m), axis=0, keepdims=True)) + m
    smooth_loss = tau * lse                              # (1, TN)
    hard_loss = tau * m        # == max(x + alpha*delta) - x_y

    s_mask = jnp.logical_and(valid, smooth)
    h_mask = jnp.logical_and(valid, hard)

    # NOTE: keep jnp.where (NOT mask * loss): padded lanes may hold NaN/Inf.
    s_sum = jnp.sum(jnp.where(s_mask, smooth_loss, 0.0), keepdims=True)
    h_sum = jnp.sum(jnp.where(h_mask, hard_loss, 0.0), keepdims=True)
    s_cnt = jnp.sum(s_mask.astype(jnp.float32), keepdims=True)
    h_cnt = jnp.sum(h_mask.astype(jnp.float32), keepdims=True)

    # Pack the four per-tile scalars into sublane rows 0..3 of the output block.
    sub = lax.broadcasted_iota(jnp.int32, (8, 128), 0)
    packed = jnp.where(sub == 0, s_sum, 0.0)
    packed = jnp.where(sub == 1, h_sum, packed)
    packed = jnp.where(sub == 2, s_cnt, packed)
    packed = jnp.where(sub == 3, h_cnt, packed)
    o_ref[...] = packed.reshape(1, 8, 128)


def _round_up(v, m):
    return ((v + m - 1) // m) * m


def _choose_tile_samples(n, c, itemsize, budget_bytes=24 * 1024 * 1024,
                         max_lanes=131072):
    """Largest lane tile whose working set (double-buffered x & y blocks plus
    ~6 f32 (C, TN) compute temps) stays inside a budget that is safe on
    v7x (64 MiB physical) as well as v5e/v6e (128 MiB)."""
    per_sample = 2 * (c * itemsize + 4) + 6 * c * 4
    cap = max(128, budget_bytes // per_sample)
    cap = (cap // 128) * 128
    cap = min(cap, max_lanes)            # bound per-op vreg/code size
    return max(128, min(cap, _round_up(n, 128)))


def smooth_top1_svm_loss(x, y, *, num_classes, tau=1.0, alpha=None,
                         tile_samples=None):
    """x: [N, num_classes] float32/bfloat16, y: [N] int labels -> scalar loss."""
    alpha = 1.0 if alpha is None else float(alpha)
    tau = float(tau)
    thresh = 1000.0
    assert x.shape[-1] == num_classes
    assert tau > 0.0 and thresh > 1.0    # count-based hard test needs margin > 0
    n, c = x.shape

    # bf16 passes through (kernel upcasts only where needed); others -> f32.
    if x.dtype not in (jnp.float32, jnp.bfloat16):
        x = x.astype(jnp.float32)
    itemsize = jnp.dtype(x.dtype).itemsize

    # Lane-dense layout: classes on sublanes, samples on lanes.
    xt = x.T                                    # (C, N)
    y_row = y.astype(jnp.int32).reshape(1, n)   # (1, N)

    tn = (tile_samples if tile_samples is not None
          else _choose_tile_samples(n, c, itemsize))
    tn = max(128, _round_up(tn, 128))
    num_tiles = pl.cdiv(n, tn)

    vmem_est = 2 * (c * tn * itemsize + tn * 4 + 8 * 128 * 4) + 6 * c * tn * 4
    vmem_limit = int(min(48 * 1024 * 1024,
                         max(32 * 1024 * 1024, (vmem_est * 3) // 2)))

    cost = pl.CostEstimate(
        flops=12 * n * c,
        transcendentals=n * c + n,
        bytes_accessed=n * c * itemsize + n * 4 + num_tiles * 8 * 128 * 4)

    kernel = functools.partial(_svm_loss_kernel, tau=tau, alpha=alpha,
                               thresh=thresh, n_samples=n)
    parts = pl.pallas_call(
        kernel,
        out_shape=jax.ShapeDtypeStruct((num_tiles, 8, 128), jnp.float32),
        grid=(num_tiles,),
        in_specs=[
            pl.BlockSpec((c, tn), lambda i: (0, i)),
            pl.BlockSpec((1, tn), lambda i: (0, i)),
        ],
        out_specs=pl.BlockSpec((1, 8, 128), lambda i: (i, 0, 0)),
        compiler_params=pltpu.CompilerParams(
            dimension_semantics=("parallel",),
            vmem_limit_bytes=vmem_limit),
        cost_estimate=cost,
    )(xt, y_row)

    # Trivial final combine (per-tile partials are independent -> "parallel").
    sums = jnp.sum(parts[:, :4, 0], axis=0)    # [s_sum, h_sum, s_cnt, h_cnt]
    s_sum, h_sum, s_cnt, h_cnt = sums[0], sums[1], sums[2], sums[3]
    s_term = jnp.where(s_cnt > 0, s_sum / jnp.maximum(s_cnt, 1.0), 0.0)
    h_term = jnp.where(h_cnt > 0, h_sum / jnp.maximum(h_cnt, 1.0), 0.0)
    return s_term + h_term


def _reference(x, y, *, num_classes, tau=1.0, alpha=1.0, thresh=1000.0):
    # Pure-jnp reference mirroring the PyTorch module.
    x = x.astype(jnp.float32)
    top2 = jax.lax.top_k(x, 2)[0]
    hard = (top2[:, 0] - top2[:, 1]) >= tau * math.log(thresh)
    smooth = jnp.logical_not(hard)
    labels = jnp.arange(num_classes)
    delta = (y[:, None] != labels[None, :]).astype(jnp.float32)
    x_y = jnp.take_along_axis(x, y[:, None], axis=1)
    z = x + alpha * delta - x_y
    smooth_loss = tau * jax.scipy.special.logsumexp(z / tau, axis=1)
    hard_loss = jnp.max(x + alpha * delta, axis=1) - x_y[:, 0]
    s_cnt = jnp.sum(smooth)
    h_cnt = jnp.sum(hard)
    s_term = jnp.where(s_cnt > 0,
                       jnp.sum(jnp.where(smooth, smooth_loss, 0.0)) / jnp.maximum(s_cnt, 1),
                       0.0)
    h_term = jnp.where(h_cnt > 0,
                       jnp.sum(jnp.where(hard, hard_loss, 0.0)) / jnp.maximum(h_cnt, 1),
                       0.0)
    return s_term + h_term


if __name__ == "__main__":
    num_classes = 4
    key = jax.random.PRNGKey(0)

    # --- test 1: small batch, single tile ---
    batch = 8
    kx, ky, key = jax.random.split(key, 3)
    x = jax.random.normal(kx, (batch, num_classes), dtype=jnp.float32)
    x = x.at[0, 0].add(20.0)   # one confidently "hard" sample (margin > log 1000)
    y = jax.random.randint(ky, (batch,), 0, num_classes, dtype=jnp.int32)

    loss = smooth_top1_svm_loss(x, y, num_classes=num_classes, tau=1.0, alpha=None)
    loss = jax.block_until_ready(loss)
    ref = _reference(x, y, num_classes=num_classes, tau=1.0, alpha=1.0)
    assert jnp.allclose(loss, ref, rtol=1e-5, atol=1e-5), (loss, ref)

    # --- test 2: multiple lane tiles + partial last tile (exercises masking
    #     and the per-tile partial-output combine) ---
    batch2 = 300
    kx2, ky2, key = jax.random.split(key, 3)
    x2 = jax.random.normal(kx2, (batch2, num_classes), dtype=jnp.float32)
    x2 = x2.at[3, 1].add(25.0)      # hard sample in tile 0
    x2 = x2.at[200, 2].add(30.0)    # hard sample in tile 1
    y2 = jax.random.randint(ky2, (batch2,), 0, num_classes, dtype=jnp.int32)

    loss2 = smooth_top1_svm_loss(x2, y2, num_classes=num_classes, tau=1.0,
                                 alpha=None, tile_samples=128)
    loss2 = jax.block_until_ready(loss2)
    ref2 = _reference(x2, y2, num_classes=num_classes, tau=1.0, alpha=1.0)
    assert jnp.allclose(loss2, ref2, rtol=1e-5, atol=1e-5), (loss2, ref2)

    print("KERNEL_OK")
</pallas_src>

<mosaic_0001>
module attributes {stable_mosaic.version = 11 : i64} {
  func.func @_svm_loss_kernel(%arg0: i32, %arg1: memref<4x128xf32, #tpu.memory_space<vmem>>, %arg2: memref<1x128xi32, #tpu.memory_space<vmem>>, %arg3: memref<1x8x128xf32, #tpu.memory_space<vmem>>) attributes {dimension_semantics = [#tpu.dimension_semantics<parallel>], iteration_bounds = array<i64: 1>, scalar_prefetch = 0 : i64, scratch_operands = 0 : i64, tpu.core_type = #tpu.core_type<tc>, window_params = [{transform_indices = @transform_0, window_bounds = array<i64: 4, 128>}, {transform_indices = @transform_1, window_bounds = array<i64: 1, 128>}, {transform_indices = @transform_2, window_bounds = array<i64: 1, 8, 128>}]} {
    %c0 = arith.constant 0 : index
    %c0_0 = arith.constant 0 : index
    %0 = vector.load %arg1[%c0, %c0_0] : memref<4x128xf32, #tpu.memory_space<vmem>>, vector<4x128xf32>
    %c0_1 = arith.constant 0 : index
    %c0_2 = arith.constant 0 : index
    %1 = vector.load %arg2[%c0_1, %c0_2] : memref<1x128xi32, #tpu.memory_space<vmem>>, vector<1x128xi32>
    %2 = tpu.iota {dimensions = array<i32: 1>} : vector<1x128xi32>
    %c128_i32 = arith.constant 128 : i32
    %3 = arith.muli %arg0, %c128_i32 : i32
    %4 = vector.broadcast %3 : i32 to vector<1x128xi32>
    %5 = arith.addi %4, %2 : vector<1x128xi32>
    %c8_i32 = arith.constant 8 : i32
    %6 = vector.broadcast %c8_i32 : i32 to vector<1x128xi32>
    %7 = arith.cmpi slt, %5, %6 : vector<1x128xi32>
    %8 = tpu.iota {dimensions = array<i32: 0>} : vector<4x128xi32>
    %9 = vector.broadcast %1 : vector<1x128xi32> to vector<4x128xi32>
    %10 = arith.cmpi eq, %8, %9 : vector<4x128xi32>
    %cst = arith.constant dense<0xFF800000> : vector<128xf32>
    %11 = vector.multi_reduction <maximumf>, %0, %cst [0] : vector<4x128xf32> to vector<128xf32>
    %12 = vector.shape_cast %11 : vector<128xf32> to vector<1x128xf32>
    %cst_3 = arith.constant 6.90775537 : f32
    %13 = vector.broadcast %cst_3 : f32 to vector<1x128xf32>
    %14 = arith.subf %12, %13 : vector<1x128xf32>
    %15 = vector.broadcast %14 : vector<1x128xf32> to vector<4x128xf32>
    %16 = arith.cmpf ogt, %0, %15 : vector<4x128xf32>
    %17 = arith.extui %16 : vector<4x128xi1> to vector<4x128xi32>
    %cst_4 = arith.constant dense<0> : vector<128xi32>
    %18 = vector.multi_reduction <add>, %17, %cst_4 [0] : vector<4x128xi32> to vector<128xi32>
    %19 = vector.shape_cast %18 : vector<128xi32> to vector<1x128xi32>
    %c1_i32 = arith.constant 1 : i32
    %20 = vector.broadcast %c1_i32 : i32 to vector<1x128xi32>
    %21 = arith.cmpi sle, %19, %20 : vector<1x128xi32>
    %cst_5 = arith.constant dense<true> : vector<1x128xi1>
    %22 = arith.xori %21, %cst_5 : vector<1x128xi1>
    %cst_6 = arith.constant 0.000000e+00 : f32
    %23 = vector.broadcast %cst_6 : f32 to vector<4x128xf32>
    %24 = arith.select %10, %0, %23 : vector<4x128xi1>, vector<4x128xf32>
    %cst_7 = arith.constant dense<0.000000e+00> : vector<128xf32>
    %25 = vector.multi_reduction <add>, %24, %cst_7 [0] : vector<4x128xf32> to vector<128xf32>
    %26 = vector.shape_cast %25 : vector<128xf32> to vector<1x128xf32>
    %27 = vector.broadcast %26 : vector<1x128xf32> to vector<4x128xf32>
    %28 = arith.subf %0, %27 : vector<4x128xf32>
    %cst_8 = arith.constant 1.000000e+00 : f32
    %29 = vector.broadcast %cst_8 : f32 to vector<4x128xf32>
    %30 = arith.mulf %28, %29 : vector<4x128xf32>
    %cst_9 = arith.constant 1.000000e+00 : f32
    %31 = vector.broadcast %cst_9 : f32 to vector<4x128xf32>
    %32 = arith.addf %30, %31 : vector<4x128xf32>
    %33 = arith.select %10, %30, %32 : vector<4x128xi1>, vector<4x128xf32>
    %cst_10 = arith.constant dense<0xFF800000> : vector<128xf32>
    %34 = vector.multi_reduction <maximumf>, %33, %cst_10 [0] : vector<4x128xf32> to vector<128xf32>
    %35 = vector.shape_cast %34 : vector<128xf32> to vector<1x128xf32>
    %36 = vector.broadcast %35 : vector<1x128xf32> to vector<4x128xf32>
    %37 = arith.subf %33, %36 : vector<4x128xf32>
    %38 = math.exp %37 : vector<4x128xf32>
    %cst_11 = arith.constant dense<0.000000e+00> : vector<128xf32>
    %39 = vector.multi_reduction <add>, %38, %cst_11 [0] : vector<4x128xf32> to vector<128xf32>
    %40 = vector.shape_cast %39 : vector<128xf32> to vector<1x128xf32>
    %41 = math.log %40 : vector<1x128xf32>
    %42 = arith.addf %41, %35 : vector<1x128xf32>
    %cst_12 = arith.constant 1.000000e+00 : f32
    %43 = vector.broadcast %cst_12 : f32 to vector<1x128xf32>
    %44 = arith.mulf %43, %42 : vector<1x128xf32>
    %cst_13 = arith.constant 1.000000e+00 : f32
    %45 = vector.broadcast %cst_13 : f32 to vector<1x128xf32>
    %46 = arith.mulf %45, %35 : vector<1x128xf32>
    %47 = arith.andi %7, %22 : vector<1x128xi1>
    %48 = arith.andi %7, %21 : vector<1x128xi1>
    %cst_14 = arith.constant 0.000000e+00 : f32
    %49 = vector.broadcast %cst_14 : f32 to vector<1x128xf32>
    %50 = arith.select %47, %44, %49 : vector<1x128xi1>, vector<1x128xf32>
    %51 = vector.shape_cast %50 : vector<1x128xf32> to vector<1x1x128xf32>
    %cst_15 = arith.constant dense<0.000000e+00> : vector<1xf32>
    %52 = vector.multi_reduction <add>, %51, %cst_15 [1, 2] : vector<1x1x128xf32> to vector<1xf32>
    %53 = vector.shape_cast %52 : vector<1xf32> to vector<1x1x1xf32>
    %54 = vector.extract %53[0, 0, 0] : f32 from vector<1x1x1xf32>
    %55 = vector.broadcast %54 : f32 to vector<1x1xf32>
    %cst_16 = arith.constant 0.000000e+00 : f32
    %56 = vector.broadcast %cst_16 : f32 to vector<1x128xf32>
    %57 = arith.select %48, %46, %56 : vector<1x128xi1>, vector<1x128xf32>
    %58 = vector.shape_cast %57 : vector<1x128xf32> to vector<1x1x128xf32>
    %cst_17 = arith.constant dense<0.000000e+00> : vector<1xf32>
    %59 = vector.multi_reduction <add>, %58, %cst_17 [1, 2] : vector<1x1x128xf32> to vector<1xf32>
    %60 = vector.shape_cast %59 : vector<1xf32> to vector<1x1x1xf32>
    %61 = vector.extract %60[0, 0, 0] : f32 from vector<1x1x1xf32>
    %62 = vector.broadcast %61 : f32 to vector<1x1xf32>
    %63 = arith.extui %47 : vector<1x128xi1> to vector<1x128xi32>
    %64 = arith.sitofp %63 : vector<1x128xi32> to vector<1x128xf32>
    %65 = vector.shape_cast %64 : vector<1x128xf32> to vector<1x1x128xf32>
    %cst_18 = arith.constant dense<0.000000e+00> : vector<1xf32>
    %66 = vector.multi_reduction <add>, %65, %cst_18 [1, 2] : vector<1x1x128xf32> to vector<1xf32>
    %67 = vector.shape_cast %66 : vector<1xf32> to vector<1x1x1xf32>
    %68 = vector.extract %67[0, 0, 0] : f32 from vector<1x1x1xf32>
    %69 = vector.broadcast %68 : f32 to vector<1x1xf32>
    %70 = arith.extui %48 : vector<1x128xi1> to vector<1x128xi32>
    %71 = arith.sitofp %70 : vector<1x128xi32> to vector<1x128xf32>
    %72 = vector.shape_cast %71 : vector<1x128xf32> to vector<1x1x128xf32>
    %cst_19 = arith.constant dense<0.000000e+00> : vector<1xf32>
    %73 = vector.multi_reduction <add>, %72, %cst_19 [1, 2] : vector<1x1x128xf32> to vector<1xf32>
    %74 = vector.shape_cast %73 : vector<1xf32> to vector<1x1x1xf32>
    %75 = vector.extract %74[0, 0, 0] : f32 from vector<1x1x1xf32>
    %76 = vector.broadcast %75 : f32 to vector<1x1xf32>
    %77 = tpu.iota {dimensions = array<i32: 0>} : vector<8x128xi32>
    %c0_i32 = arith.constant 0 : i32
    %78 = vector.broadcast %c0_i32 : i32 to vector<8x128xi32>
    %79 = arith.cmpi eq, %77, %78 : vector<8x128xi32>
    %cst_20 = arith.constant 0.000000e+00 : f32
    %80 = vector.shape_cast %55 : vector<1x1xf32> to vector<1x1xf32>
    %81 = vector.broadcast %80 : vector<1x1xf32> to vector<8x128xf32>
    %82 = vector.broadcast %cst_20 : f32 to vector<8x128xf32>
    %83 = arith.select %79, %81, %82 : vector<8x128xi1>, vector<8x128xf32>
    %c1_i32_21 = arith.constant 1 : i32
    %84 = vector.broadcast %c1_i32_21 : i32 to vector<8x128xi32>
    %85 = arith.cmpi eq, %77, %84 : vector<8x128xi32>
    %86 = vector.shape_cast %62 : vector<1x1xf32> to vector<1x1xf32>
    %87 = vector.broadcast %86 : vector<1x1xf32> to vector<8x128xf32>
    %88 = arith.select %85, %87, %83 : vector<8x128xi1>, vector<8x128xf32>
    %c2_i32 = arith.constant 2 : i32
    %89 = vector.broadcast %c2_i32 : i32 to vector<8x128xi32>
    %90 = arith.cmpi eq, %77, %89 : vector<8x128xi32>
    %91 = vector.shape_cast %69 : vector<1x1xf32> to vector<1x1xf32>
    %92 = vector.broadcast %91 : vector<1x1xf32> to vector<8x128xf32>
    %93 = arith.select %90, %92, %88 : vector<8x128xi1>, vector<8x128xf32>
    %c3_i32 = arith.constant 3 : i32
    %94 = vector.broadcast %c3_i32 : i32 to vector<8x128xi32>
    %95 = arith.cmpi eq, %77, %94 : vector<8x128xi32>
    %96 = vector.shape_cast %76 : vector<1x1xf32> to vector<1x1xf32>
    %97 = vector.broadcast %96 : vector<1x1xf32> to vector<8x128xf32>
    %98 = arith.select %95, %97, %93 : vector<8x128xi1>, vector<8x128xf32>
    %99 = vector.shape_cast %98 : vector<8x128xf32> to vector<1x8x128xf32>
    %c0_22 = arith.constant 0 : index
    %c0_23 = arith.constant 0 : index
    %c0_24 = arith.constant 0 : index
    %100 = vector.load %arg3[%c0_22, %c0_23, %c0_24] : memref<1x8x128xf32, #tpu.memory_space<vmem>>, vector<1x8x128xf32>
    tpu.vector_store %arg3[%c0_22, %c0_23, %c0_24], %99 {strides = array<i32>} : memref<1x8x128xf32, #tpu.memory_space<vmem>>, vector<1x8x128xf32>,
    return
  }
  func.func @transform_0(%arg0: i32) -> (i32, i32) {
    %c0_i32 = arith.constant 0 : i32
    %c0_i32_0 = arith.constant 0 : i32
    return %c0_i32, %arg0 : i32, i32
  }
  func.func @transform_1(%arg0: i32) -> (i32, i32) {
    %c0_i32 = arith.constant 0 : i32
    %c0_i32_0 = arith.constant 0 : i32
    return %c0_i32, %arg0 : i32, i32
  }
  func.func @transform_2(%arg0: i32) -> (i32, i32, i32) {
    %c0_i32 = arith.constant 0 : i32
    %c0_i32_0 = arith.constant 0 : i32
    %c0_i32_1 = arith.constant 0 : i32
    return %arg0, %c0_i32, %c0_i32_0 : i32, i32, i32
  }
}

</mosaic_0001>

<llo_original>
// kernel: tpu_custom_call.1
$region0: #{tpu_custom_call.1}
  #allocation0 [shape = 'u32[]', space=smem, size = 0x4, offset = 0x4, fixed_abs, tag = 'smem constant byte address 0x4 - core index']
  #allocation1 [shape = 'u32[144,128]{1,0:T(1,128)}', space=vmem, size = 0x12000, scoped, tag = 'internal scratch']
  %s0 = inlined_call_operand.hbm [shape: f32[4,8], index: 0, kind: input, shape index: {}]
  %s1 = inlined_call_operand.vmem [shape: s32[1,8], index: 1, kind: input, shape index: {}]
  %s2 = inlined_call_operand.hbm [shape: f32[1,8,128], index: 2, kind: output, shape index: {}]
  %s3 = sld [smem:[#allocation0]]
  $region22: #{tpu_custom_call.1} parent=0
    _
  %s5 = ssub.s32 1, %s3
  %s6 = scalar_select 0, %s5, %s3
  $region1: #{tpu_custom_call.1} parent=0
    #allocation2 [shape = 'u8[2048]{0}', space=vmem, size = 0x800, scoped, tag = 'input window, operand 0, single buffered']
    #allocation3 [shape = 's32[1]{0}', space=sflag, size = 0x4, scoped, tag = 'scoped memory for tpu_custom_call.1']
    #allocation4 [shape = 's32[1]{0}', space=sflag, size = 0x4, scoped, tag = 'scoped memory for tpu_custom_call.1']
    #allocation5 [shape = 'u8[4096]{0}', space=vmem, size = 0x1000, scoped, tag = 'output window, operand 0, single buffered']
    %7 = vsyncpa [#allocation3], 0
    %8 = vsyncpa [#allocation4], 0
    // Predicated region
    $region2: #{tpu_custom_call.1} parent=1 // pred_check
      _
    $region3: #{tpu_custom_call.1} parent=1 // pred_check_branch
      %10 = sbr.rel (0) target = $region5
    $region4: #{tpu_custom_call.1} parent=1 // pred_region
      %s12 = ssub.s32 64, 64
      %13 = vsyncadd [#allocation3], %s12
      %s15 = sshll.u32 [#allocation2], 4
      %s16 = int_to_ptr.vmem [resolvable:$true] %s15
      %18 = dma.hbm_to_vmem [thread:$0]  %s0, 64, %s16, [#allocation3]
    $region5: #{tpu_custom_call.1} parent=1 // pred_fallthru
      _
    // Predicated region
    $region6: #{tpu_custom_call.1} parent=1 // pred_check
      _
    $region7: #{tpu_custom_call.1} parent=1 // pred_check_branch
      %20 = sbr.rel (0) target = $region9
    $region8: #{tpu_custom_call.1} parent=1 // pred_region
      _
    $region9: #{tpu_custom_call.1} parent=1 // pred_fallthru
      _
    // Predicated region
    $region10: #{tpu_custom_call.1} parent=1 // pred_check
      _
    $region11: #{tpu_custom_call.1} parent=1 // pred_check_branch
      %22 = sbr.rel (0) target = $region13
    $region12: #{tpu_custom_call.1} parent=1 // pred_region
      %23 = dma.done [#allocation3], 64
    $region13: #{tpu_custom_call.1} parent=1 // pred_fallthru
      _
    %v24 = vld [vmem:[#allocation2] sm:$0xf]
    %v25 = vld [vmem:[%s1] sm:$0x1]
    %v26 = vlaneseq
    %v27 = vand.u32 %v26, 127
    %s28 = smul.u32 0, 128
    %v29 = vstv %s28
    %v30 = vadd.s32 %v29, %v27
    %vm31 = vcmp.lt.s32.totalorder %v30, 8
    %v32 = vlaneseq
    %v33 = vshrl.u32 %v32, 7
    %v34 = vlaneseq
    %v35 = vshrl.u32 %v34, 7
    %v36 = vsub.s32 0, %v35
    %v37 = vrot.slane %v25, %v36
    %vm38 = vcmp.eq.s32.totalorder %v33, %v37
    %vm39 = vcmask 1043456
    %v40 = vsel %vm39, %v24, -inf
    %v41 = vrot.slane %v40, 4
    %v42 = vmax.f32 %v40, %v41
    %v43 = vrot.slane %v42, 2
    %v44 = vmax.f32 %v42, %v43
    %v45 = vrot.slane %v44, 1
    %v46 = vmax.f32 %v44, %v45
    %v47 = vsub.f32 %v46, 6.9077554
    %vm48 = vcmp.gt.f32.partialorder %v24, %v47
    %v49 = vsel %vm48, 1, 0
    %v50 = vsel %vm39, %v49, 0
    %v51 = vrot.slane %v50, 4
    %v52 = vadd.s32 %v50, %v51
    %v53 = vrot.slane %v52, 2
    %v54 = vadd.s32 %v52, %v53
    %v55 = vrot.slane %v54, 1
    %v56 = vadd.s32 %v54, %v55
    %vm57 = vcmp.le.s32.totalorder %v56, 1
    %vm58 = vmxor %vm57, 1
    %v59 = vsel %vm38, %v24, 0.0
    %v60 = vsel %vm39, %v59, 0.0
    %v61 = vrot.slane %v60, 4
    %v62 = vadd.f32 %v60, %v61
    %v63 = vrot.slane %v62, 2
    %v64 = vadd.f32 %v62, %v63
    %v65 = vrot.slane %v64, 1
    %v66 = vadd.f32 %v64, %v65
    %v67 = vsub.f32 %v24, %v66
    %v68 = vadd.f32 %v67, 1.0
    %v69 = vsel %vm38, %v67, %v68
    %v70 = vsel %vm39, %v69, -inf
    %v71 = vrot.slane %v70, 4
    %v72 = vmax.f32 %v70, %v71
    %v73 = vrot.slane %v72, 2
    %v74 = vmax.f32 %v72, %v73
    %v75 = vrot.slane %v74, 1
    %v76 = vmax.f32 %v74, %v75
    %v77 = vsub.f32 %v69, %v76
    %v78 = vmul.f32 %v77, 1.442695
    %v79 = vpow.pop %v78
    %v80 = vsel %vm39, %v79, 0.0
    %v81 = vrot.slane %v80, 4
    %v82 = vadd.f32 %v80, %v81
    %v83 = vrot.slane %v82, 2
    %v84 = vadd.f32 %v82, %v83
    %v85 = vrot.slane %v84, 1
    %v86 = vadd.f32 %v84, %v85
    %v87 = vlog2.pop %v86
    %v88 = vmul.f32 %v87, 0.6931472
    %v89 = vadd.f32 %v88, %v76
    %vm90 = vmand %vm31, %vm58
    %vm91 = vmand %vm31, %vm57
    %v92 = vsel %vm90, %v89, 0.0
    %vm93 = vcmask 1040384
    %v94 = vsel %vm93, %v92, 0.0
    %95 = vadd.xlane.f32.xlu0 %v94
    %v96 = vpop.xlane.xlu0 %95
    %v97 = vrot.slane %v96, 4
    %v98 = vadd.f32 %v96, %v97
    %v99 = vrot.slane %v98, 2
    %v100 = vadd.f32 %v98, %v99
    %v101 = vrot.slane %v100, 1
    %v102 = vadd.f32 %v100, %v101
    %s103 = vtos %v102
    %v104 = vsel %vm91, %v76, 0.0
    %v105 = vsel %vm93, %v104, 0.0
    %106 = vadd.xlane.f32.xlu0 %v105
    %v107 = vpop.xlane.xlu0 %106
    %v108 = vrot.slane %v107, 4
    %v109 = vadd.f32 %v107, %v108
    %v110 = vrot.slane %v109, 2
    %v111 = vadd.f32 %v109, %v110
    %v112 = vrot.slane %v111, 1
    %v113 = vadd.f32 %v111, %v112
    %s114 = vtos %v113
    %v115 = vsel %vm90, 1, 0
    %v116 = vcvt.s32.f32 %v115
    %v117 = vsel %vm93, %v116, 0.0
    %118 = vadd.xlane.f32.xlu0 %v117
    %v119 = vpop.xlane.xlu0 %118
    %v120 = vrot.slane %v119, 4
    %v121 = vadd.f32 %v119, %v120
    %v122 = vrot.slane %v121, 2
    %v123 = vadd.f32 %v121, %v122
    %v124 = vrot.slane %v123, 1
    %v125 = vadd.f32 %v123, %v124
    %s126 = vtos %v125
    %v127 = vsel %vm91, 1, 0
    %v128 = vcvt.s32.f32 %v127
    %v129 = vsel %vm93, %v128, 0.0
    %130 = vadd.xlane.f32.xlu0 %v129
    %v131 = vpop.xlane.xlu0 %130
    %v132 = vrot.slane %v131, 4
    %v133 = vadd.f32 %v131, %v132
    %v134 = vrot.slane %v133, 2
    %v135 = vadd.f32 %v133, %v134
    %v136 = vrot.slane %v135, 1
    %v137 = vadd.f32 %v135, %v136
    %s138 = vtos %v137
    %vm139 = vcmp.eq.s32.totalorder %v33, 0
    %v140 = vstv %s103
    %v141 = vsel %vm139, %v140, 0.0
    %vm142 = vcmp.eq.s32.totalorder %v33, 1
    %v143 = vstv %s114
    %v144 = vsel %vm142, %v143, %v141
    %vm145 = vcmp.eq.s32.totalorder %v33, 2
    %v146 = vstv %s126
    %v147 = vsel %vm145, %v146, %v144
    %vm148 = vcmp.eq.s32.totalorder %v33, 3
    %v149 = vstv %s138
    %v150 = vsel %vm148, %v149, %v147
    %151 = vst [vmem:[#allocation5] sm:$0xff] %v150
    // Predicated region
    $region14: #{tpu_custom_call.1} parent=1 // pred_check
      _
    $region15: #{tpu_custom_call.1} parent=1 // pred_check_branch
      %153 = sbr.rel (0) target = $region17
    $region16: #{tpu_custom_call.1} parent=1 // pred_region
      %s155 = ssub.s32 128, 128
      %156 = vsyncadd [#allocation4], %s155
      %s158 = sshll.u32 [#allocation5], 4
      %s159 = int_to_ptr.vmem [resolvable:$true] %s158
      %161 = dma.vmem_to_hbm [thread:$0]  %s159, 128, %s2, [#allocation4]
    $region17: #{tpu_custom_call.1} parent=1 // pred_fallthru
      _
    // Predicated region
    $region18: #{tpu_custom_call.1} parent=1 // pred_check
      _
    $region19: #{tpu_custom_call.1} parent=1 // pred_check_branch
      %163 = sbr.rel (0) target = $region21
    $region20: #{tpu_custom_call.1} parent=1 // pred_region
      %164 = dma.done [#allocation4], 128
    $region21: #{tpu_custom_call.1} parent=1 // pred_fallthru
      _
    %165 = vsyncpa [#allocation3], 1
    %166 = vsyncpa [#allocation4], 1

</llo_original>
